<compile_context>
chip_gen: v7x
topology: tpu7x:2x2x1
jax: 0.10.0
libtpu: 0.0.40
codegen_flags: <defaults>
</compile_context>

<pallas_src>
import functools

import jax
import jax.numpy as jnp
from jax.experimental import pallas as pl
from jax.experimental.pallas import tpu as pltpu


_TARGET_BLOCK_BYTES = 4 * 1024 * 1024   # ~4 MiB / array / grid step
_SLACK_BYTES = 8 * 1024 * 1024          # compiler scratch / semaphores / misc


def _round_up(x, m):
    return ((x + m - 1) // m) * m


def _vmem_capacity_bytes():
    # v7x is the most constrained generation (64 MiB per TensorCore); use it as
    # the conservative fallback if the query is unavailable.
    try:
        return int(pltpu.get_tpu_info().vmem_capacity_bytes)
    except Exception:
        return 64 * 1024 * 1024


# -----------------------------------------------------------------------------
# Fused kernel: pool + 1x1 conv + sigmoid + blend in one pass over f1 / f2.
# -----------------------------------------------------------------------------
def _dynamic_gate_kernel(wT_ref, b_ref, f1_ref, f2_ref, o_ref, *, inv_hw):
    # f1 / f2 / o block: (nb, C, HW) in the native feature dtype.
    f1 = f1_ref[...]
    f2 = f2_ref[...]

    # AdaptiveAvgPool2d(1): f32 accumulation without materializing an f32 copy
    # of the whole block.                              -> (nb, C)
    pooled = jnp.sum(f1, axis=2, dtype=jnp.float32) * inv_hw

    # Conv2d(C, C, kernel_size=1) on the pooled 1x1 map == pooled @ W^T + b.
    # The transpose is hoisted to the wrapper (wT_ref holds W^T).
    logits = (
        jnp.dot(pooled, wT_ref[...], preferred_element_type=jnp.float32)
        + b_ref[...]
    )                                                  # (nb, C)

    # Sigmoid gate, cast to the feature dtype, broadcast over spatial.
    g = jax.nn.sigmoid(logits).astype(o_ref.dtype)[:, :, None]   # (nb, C, 1)

    # g*f1 + (1-g)*f2 == f2 + g*(f1 - f2), computed in the native dtype.
    o_ref[...] = f2 + g * (f1 - f2)


# -----------------------------------------------------------------------------
# Blend-only kernel (fallback when one batch element's (C, HW) tile is too big
# for VMEM): the gate is computed with plain XLA, HW is tiled freely here.
# -----------------------------------------------------------------------------
def _blend_kernel(g_ref, f1_ref, f2_ref, o_ref):
    g = g_ref[...].astype(o_ref.dtype)                 # (rb, 1)
    f1 = f1_ref[...]
    f2 = f2_ref[...]
    o_ref[...] = f2 + g * (f1 - f2)


# -----------------------------------------------------------------------------
# Block-size / VMEM planning.
# -----------------------------------------------------------------------------
def _fused_plan(N, C, HW, itemsize, ceiling):
    """Returns (nb, vmem_limit) for the fused path, or None if it cannot fit."""
    c_t = _round_up(C, 8)
    hw_t = _round_up(HW, 128)
    per_batch = c_t * hw_t * itemsize            # VMEM bytes / batch elem / array

    # W^T and bias are (currently) double-buffered by the pipeline.
    const_bytes = 2 * (c_t * _round_up(C, 128) + _round_up(C, 128)) * 4

    avail = ceiling - const_bytes - _SLACK_BYTES
    # 3 pipelined arrays x 2 buffers  +  ~2 block-sized in-kernel temporaries.
    nb_max = avail // (8 * per_batch) if avail > 0 else 0
    if nb_max < 1:
        return None                              # does not fit -> split path

    nb = max(1, _TARGET_BLOCK_BYTES // per_batch)
    # Give the pipeline / megacore enough grid steps when the batch allows it.
    if N >= 16:
        nb = min(nb, max(1, N // 8))
    elif N >= 2:
        nb = min(nb, max(1, N // 2))
    nb = int(min(nb, nb_max, N))

    need = (6 * nb * per_batch                   # double-buffered f1 / f2 / out
            + 2 * nb * per_batch                 # in-kernel temporaries
            + const_bytes + _SLACK_BYTES)
    vmem_limit = int(min(max(need, 32 << 20), ceiling))
    return nb, vmem_limit


def _blend_plan(NC, HW, itemsize, ceiling):
    if NC <= 8:
        rb = NC                                  # full dim (legal even if < 8)
    else:
        rb = min(256, (NC // 8) * 8)             # multiple of 8
    hwb = max(128, (_TARGET_BLOCK_BYTES // (rb * itemsize)) // 128 * 128)
    if hwb >= HW:
        hwb = HW                                 # full dim (legal even if % 128)
    need = 8 * rb * hwb * itemsize + 4 * rb * 4 + _SLACK_BYTES
    vmem_limit = int(min(max(need, 32 << 20), ceiling))
    return rb, hwb, vmem_limit


# -----------------------------------------------------------------------------
# Public wrapper.
# -----------------------------------------------------------------------------
def dynamic_gate(cnn_feat1, cnn_feat2, weight, bias, *, force_split=False):
    """DynamicGate forward.

    cnn_feat1, cnn_feat2: (N, C, H, W) features (f32 or bf16 — bf16 stays bf16
    end-to-end in the kernel). weight: (C, C) or (C, C, 1, 1). bias: (C,).
    """
    N, C, H, W = cnn_feat1.shape
    HW = H * W
    dtype = cnn_feat1.dtype
    itemsize = jnp.dtype(dtype).itemsize

    if weight.ndim == 4:                         # Conv2d weight (C, C, 1, 1)
        weight = weight.reshape(C, C)
    wT = weight.T.astype(jnp.float32)            # hoist transpose out of the kernel
    b2 = bias.reshape(1, C).astype(jnp.float32)

    # Free (metadata-only) reshapes -- no padding, no HBM copies.
    f1 = cnn_feat1.reshape(N, C, HW)
    f2 = cnn_feat2.reshape(N, C, HW)

    ceiling = min(int(0.75 * _vmem_capacity_bytes()), 96 * 1024 * 1024)

    plan = None if force_split else _fused_plan(N, C, HW, itemsize, ceiling)

    if plan is not None:
        nb, vmem_limit = plan
        grid_n = pl.cdiv(N, nb)
        kernel = functools.partial(_dynamic_gate_kernel, inv_hw=1.0 / float(HW))
        out = pl.pallas_call(
            kernel,
            out_shape=jax.ShapeDtypeStruct((N, C, HW), dtype),
            grid_spec=pltpu.PrefetchScalarGridSpec(
                num_scalar_prefetch=0,
                grid=(grid_n,),
                in_specs=[
                    # TODO(synk): pipeline_mode=pl.Buffered(1) on these constant
                    # operands would reclaim ~C^2*4 B of VMEM for large C.
                    pl.BlockSpec((C, C), lambda n: (0, 0)),            # W^T
                    pl.BlockSpec((1, C), lambda n: (0, 0)),            # bias
                    pl.BlockSpec((nb, C, HW), lambda n: (n, 0, 0)),    # feat1
                    pl.BlockSpec((nb, C, HW), lambda n: (n, 0, 0)),    # feat2
                ],
                out_specs=pl.BlockSpec((nb, C, HW), lambda n: (n, 0, 0)),
            ),
            compiler_params=pltpu.CompilerParams(
                dimension_semantics=("parallel",),
                vmem_limit_bytes=vmem_limit,
            ),
        )(wT, b2, f1, f2)
        return out.reshape(N, C, H, W)

    # ---- Split path: gate via XLA (reads f1 once), blend via Pallas. ----
    pooled = jnp.mean(cnn_feat1, axis=(2, 3), dtype=jnp.float32)       # (N, C)
    logits = pooled @ wT + b2                                          # (N, C)
    g = jax.nn.sigmoid(logits).reshape(N * C, 1)                       # f32

    f1_2d = cnn_feat1.reshape(N * C, HW)
    f2_2d = cnn_feat2.reshape(N * C, HW)
    rb, hwb, vmem_limit = _blend_plan(N * C, HW, itemsize, ceiling)

    out2d = pl.pallas_call(
        _blend_kernel,
        out_shape=jax.ShapeDtypeStruct((N * C, HW), dtype),
        grid_spec=pltpu.PrefetchScalarGridSpec(
            num_scalar_prefetch=0,
            grid=(pl.cdiv(N * C, rb), pl.cdiv(HW, hwb)),
            in_specs=[
                pl.BlockSpec((rb, 1), lambda r, h: (r, 0)),            # gate
                pl.BlockSpec((rb, hwb), lambda r, h: (r, h)),          # feat1
                pl.BlockSpec((rb, hwb), lambda r, h: (r, h)),          # feat2
            ],
            out_specs=pl.BlockSpec((rb, hwb), lambda r, h: (r, h)),
        ),
        compiler_params=pltpu.CompilerParams(
            dimension_semantics=("parallel", "parallel"),
            vmem_limit_bytes=vmem_limit,
        ),
    )(g, f1_2d, f2_2d)
    return out2d.reshape(N, C, H, W)


def reference_dynamic_gate(cnn_feat1, cnn_feat2, weight, bias):
    # Pure-JAX reference matching the PyTorch forward exactly.
    pooled = jnp.mean(cnn_feat1, axis=(2, 3))                 # (N, C)
    logits = pooled @ weight.T + bias[None, :]                # (N, C)
    importance = jax.nn.sigmoid(logits)[:, :, None, None]     # (N, C, 1, 1)
    return importance * cnn_feat1 + (1.0 - importance) * cnn_feat2


if __name__ == "__main__":
    key = jax.random.PRNGKey(0)
    k1, k2, kw, kb = jax.random.split(key, 4)

    N, C, H, W = 2, 4, 16, 16

    cnn_feat1 = jax.random.normal(k1, (N, C, H, W), dtype=jnp.float32)
    cnn_feat2 = jax.random.normal(k2, (N, C, H, W), dtype=jnp.float32)

    # Deterministic parameter init for Conv2d(C, C, kernel_size=1):
    # weight (C, C, 1, 1) -> squeezed to (C, C); bias (C,).
    fan_in = float(C)  # C_in * 1 * 1
    bound = 1.0 / (fan_in ** 0.5)
    weight = jax.random.uniform(kw, (C, C), jnp.float32, -bound, bound)
    bias = jax.random.uniform(kb, (C,), jnp.float32, -bound, bound)

    ref = reference_dynamic_gate(cnn_feat1, cnn_feat2, weight, bias)

    # Fused single-pass kernel (main path).
    out = jax.block_until_ready(dynamic_gate(cnn_feat1, cnn_feat2, weight, bias))
    assert out.shape == (N, C, H, W)
    assert jnp.allclose(out, ref, atol=1e-5, rtol=1e-5), (
        f"fused path max err {jnp.max(jnp.abs(out - ref))}"
    )

    # Also exercise the large-(C*HW) fallback (XLA gate + blend-only kernel).
    out_split = jax.block_until_ready(
        dynamic_gate(cnn_feat1, cnn_feat2, weight, bias, force_split=True)
    )
    assert jnp.allclose(out_split, ref, atol=1e-5, rtol=1e-5), (
        f"split path max err {jnp.max(jnp.abs(out_split - ref))}"
    )

    print("KERNEL_OK")
</pallas_src>

<mosaic_0001>
module attributes {stable_mosaic.version = 11 : i64} {
  func.func @_dynamic_gate_kernel(%arg0: i32, %arg1: memref<4x4xf32, #tpu.memory_space<vmem>>, %arg2: memref<1x4xf32, #tpu.memory_space<vmem>>, %arg3: memref<1x4x256xf32, #tpu.memory_space<vmem>>, %arg4: memref<1x4x256xf32, #tpu.memory_space<vmem>>, %arg5: memref<1x4x256xf32, #tpu.memory_space<vmem>>) attributes {dimension_semantics = [#tpu.dimension_semantics<parallel>], iteration_bounds = array<i64: 2>, scalar_prefetch = 0 : i64, scratch_operands = 0 : i64, tpu.core_type = #tpu.core_type<tc>, window_params = [{pipeline_mode = #tpu.pipeline_mode<synchronous>, transform_indices = @transform_0, window_bounds = array<i64: 4, 4>}, {pipeline_mode = #tpu.pipeline_mode<synchronous>, transform_indices = @transform_1, window_bounds = array<i64: 1, 4>}, {transform_indices = @transform_2, window_bounds = array<i64: 1, 4, 256>}, {transform_indices = @transform_3, window_bounds = array<i64: 1, 4, 256>}, {transform_indices = @transform_4, window_bounds = array<i64: 1, 4, 256>}]} {
    %c0 = arith.constant 0 : index
    %c0_0 = arith.constant 0 : index
    %c0_1 = arith.constant 0 : index
    %0 = vector.load %arg3[%c0, %c0_0, %c0_1] : memref<1x4x256xf32, #tpu.memory_space<vmem>>, vector<1x4x256xf32>
    %c0_2 = arith.constant 0 : index
    %c0_3 = arith.constant 0 : index
    %c0_4 = arith.constant 0 : index
    %1 = vector.load %arg4[%c0_2, %c0_3, %c0_4] : memref<1x4x256xf32, #tpu.memory_space<vmem>>, vector<1x4x256xf32>
    %cst = arith.constant dense<0.000000e+00> : vector<1x4xf32>
    %2 = vector.multi_reduction <add>, %0, %cst [2] : vector<1x4x256xf32> to vector<1x4xf32>
    %cst_5 = arith.constant 3.906250e-03 : f32
    %3 = vector.broadcast %cst_5 : f32 to vector<1x4xf32>
    %4 = arith.mulf %2, %3 : vector<1x4xf32>
    %c0_6 = arith.constant 0 : index
    %c0_7 = arith.constant 0 : index
    %5 = vector.load %arg1[%c0_6, %c0_7] : memref<4x4xf32, #tpu.memory_space<vmem>>, vector<4x4xf32>
    %cst_8 = arith.constant dense<0.000000e+00> : vector<1x4xf32>
    %6 = tpu.matmul %4, %5, %cst_8 {dimension_numbers = #tpu.dot_dimension_numbers<[1], [0], [0], [1], [0, 0, 1, 1], [], []>} : vector<1x4xf32>, vector<4x4xf32>, vector<1x4xf32> -> vector<1x4xf32>
    %c0_9 = arith.constant 0 : index
    %c0_10 = arith.constant 0 : index
    %7 = vector.load %arg2[%c0_9, %c0_10] : memref<1x4xf32, #tpu.memory_space<vmem>>, vector<1x4xf32>
    %8 = arith.addf %6, %7 : vector<1x4xf32>
    %9 = arith.negf %8 : vector<1x4xf32>
    %10 = math.exp %9 : vector<1x4xf32>
    %cst_11 = arith.constant 1.000000e+00 : f32
    %11 = vector.broadcast %cst_11 : f32 to vector<1x4xf32>
    %12 = arith.addf %11, %10 : vector<1x4xf32>
    %13 = arith.divf %11, %12 : vector<1x4xf32>
    %14 = vector.shape_cast %13 : vector<1x4xf32> to vector<1x4x1xf32>
    %15 = arith.subf %0, %1 : vector<1x4x256xf32>
    %16 = vector.broadcast %14 : vector<1x4x1xf32> to vector<1x4x256xf32>
    %17 = arith.mulf %16, %15 : vector<1x4x256xf32>
    %18 = arith.addf %1, %17 : vector<1x4x256xf32>
    %c0_12 = arith.constant 0 : index
    %c0_13 = arith.constant 0 : index
    %c0_14 = arith.constant 0 : index
    %19 = vector.load %arg5[%c0_12, %c0_13, %c0_14] : memref<1x4x256xf32, #tpu.memory_space<vmem>>, vector<1x4x256xf32>
    tpu.vector_store %arg5[%c0_12, %c0_13, %c0_14], %18 {strides = array<i32>} : memref<1x4x256xf32, #tpu.memory_space<vmem>>, vector<1x4x256xf32>,
    return
  }
  func.func @transform_0(%arg0: i32) -> (i32, i32) {
    %c0_i32 = arith.constant 0 : i32
    %c0_i32_0 = arith.constant 0 : i32
    %c0_i32_1 = arith.constant 0 : i32
    return %c0_i32, %c0_i32_0 : i32, i32
  }
  func.func @transform_1(%arg0: i32) -> (i32, i32) {
    %c0_i32 = arith.constant 0 : i32
    %c0_i32_0 = arith.constant 0 : i32
    %c0_i32_1 = arith.constant 0 : i32
    return %c0_i32, %c0_i32_0 : i32, i32
  }
  func.func @transform_2(%arg0: i32) -> (i32, i32, i32) {
    %c0_i32 = arith.constant 0 : i32
    %c0_i32_0 = arith.constant 0 : i32
    %c0_i32_1 = arith.constant 0 : i32
    return %arg0, %c0_i32, %c0_i32_0 : i32, i32, i32
  }
  func.func @transform_3(%arg0: i32) -> (i32, i32, i32) {
    %c0_i32 = arith.constant 0 : i32
    %c0_i32_0 = arith.constant 0 : i32
    %c0_i32_1 = arith.constant 0 : i32
    return %arg0, %c0_i32, %c0_i32_0 : i32, i32, i32
  }
  func.func @transform_4(%arg0: i32) -> (i32, i32, i32) {
    %c0_i32 = arith.constant 0 : i32
    %c0_i32_0 = arith.constant 0 : i32
    %c0_i32_1 = arith.constant 0 : i32
    return %arg0, %c0_i32, %c0_i32_0 : i32, i32, i32
  }
}

</mosaic_0001>

<llo_original>
// kernel: tpu_custom_call.1
$region0: #{tpu_custom_call.1}
  #allocation0 [shape = 'u32[]', space=smem, size = 0x4, offset = 0x4, fixed_abs, tag = 'smem constant byte address 0x4 - core index']
  #allocation1 [shape = 'u32[144,128]{1,0:T(1,128)}', space=vmem, size = 0x12000, scoped, tag = 'internal scratch']
  %s0 = inlined_call_operand.hbm [shape: f32[4,4], index: 0, kind: input, shape index: {}]
  %s1 = inlined_call_operand.vmem [shape: f32[1,4], index: 1, kind: input, shape index: {}]
  %s2 = inlined_call_operand.hbm [shape: f32[2,4,256], index: 2, kind: input, shape index: {}]
  %s3 = inlined_call_operand.hbm [shape: f32[2,4,256], index: 3, kind: input, shape index: {}]
  %s4 = inlined_call_operand.hbm [shape: f32[2,4,256], index: 4, kind: output, shape index: {}]
  %s5 = sld [smem:[#allocation0]]
  $region61: #{tpu_custom_call.1} parent=0
    _
  %s7 = ssub.s32 1, %s5
  %s8 = scalar_select 0, %s7, %s5
  $region1: #{tpu_custom_call.1} parent=0
    #allocation2 [shape = 'u8[2048]{0}', space=vmem, size = 0x800, scoped, tag = 'input window, operand 0, single buffered']
    #allocation3 [shape = 's32[2]{0}', space=sflag, size = 0x8, scoped, tag = 'scoped memory for tpu_custom_call.1']
    #allocation4 [shape = 's32[2]{0}', space=sflag, size = 0x8, scoped, tag = 'scoped memory for tpu_custom_call.1']
    #allocation5 [shape = 'u8[8192]{0}', space=vmem, size = 0x2000, scoped, tag = 'input window, operand 2']
    #allocation6 [shape = 's32[2]{0}', space=sflag, size = 0x8, scoped, tag = 'scoped memory for tpu_custom_call.1']
    #allocation7 [shape = 'u8[8192]{0}', space=vmem, size = 0x2000, scoped, tag = 'input window, operand 3']
    #allocation8 [shape = 'u8[8192]{0}', space=vmem, size = 0x2000, scoped, tag = 'output window, operand 0']
    %9 = vsyncpa [#allocation3], 0
    %10 = vsyncpa [#allocation6], 0
    %s11 = scalar_lea.sflag [#allocation6], 1
    %12 = vsyncpa %s11, 0
    %13 = vsyncpa [#allocation4], 0
    %s14 = scalar_lea.sflag [#allocation4], 1
    %15 = vsyncpa %s14, 0
    loop: start=0, step=1, limit=4
    $region2: #{tpu_custom_call.1} parent=1 // loop_pre_header
      _
    $region3: #{tpu_custom_call.1} parent=1 // loop_header
      %s17 = sphi 0, %s21
      %p18 = scmp.ge.s32.totalorder %s17, 4
      %s25 = sphi 0, %s25
      %s27 = sphi 0, %s25
      %s28 = sphi 0, %s27
      %s42 = sphi 0, %s28
      %s46 = sphi 0, %s46
      %s48 = sphi 0, %s46
      %s49 = sphi 0, %s48
      %s63 = sphi 0, %s49
      %s69 = sphi 0, %s71
      %s72 = sphi 0, %s69
      %s73 = sphi 0, %s72
      %s89 = sphi 0, %s73
      %s95 = sphi 0, %s97
      %s98 = sphi 0, %s95
      %s99 = sphi 0, %s98
      %s115 = sphi 0, %s99
      %s121 = sphi 0, %s123
      %s124 = sphi 0, %s121
      %s125 = sphi 0, %s124
      %s141 = sphi 0, %s125
    $region4: #{tpu_custom_call.1} parent=1 // loop_header_branch
      %20 = sbr.rel (%p18) target = $region8
    $region5: #{tpu_custom_call.1} parent=1 // loop_body
      %s22 = ssub.s32 %s17, 1
      %s23 = ssub.s32 %s17, 2
      %s24 = sadd.s32 %s17, 1
      %s26 = sadd.s32 %s25, 1
      %p29 = scmp.eq.s32.totalorder %s17, 1
      %p30 = scmp.ne.s32.totalorder %s25, %s27
      %p31 = scmp.eq.s32.totalorder %s17, 0
      %p32 = por %p30, %p31
      %p33 = scmp.ne.s32.totalorder %s25, %s27
      %p34 = scmp.eq.s32.totalorder %s22, 1
      %p35 = por %p33, %p34
      %p36 = scmp.ne.s32.totalorder %s27, %s28
      %p37 = scmp.eq.s32.totalorder %s22, 0
      %p38 = por %p36, %p37
      %p39 = scmp.ne.s32.totalorder %s27, %s28
      %p40 = scmp.eq.s32.totalorder %s23, 1
      %p41 = por %p39, %p40
      %p43 = scmp.ne.s32.totalorder %s28, %s42
      %p44 = scmp.eq.s32.totalorder %s23, 0
      %p45 = por %p43, %p44
      %s47 = sadd.s32 %s46, 1
      %p50 = scmp.eq.s32.totalorder %s17, 1
      %p51 = scmp.ne.s32.totalorder %s46, %s48
      %p52 = scmp.eq.s32.totalorder %s17, 0
      %p53 = por %p51, %p52
      %p54 = scmp.ne.s32.totalorder %s46, %s48
      %p55 = scmp.eq.s32.totalorder %s22, 1
      %p56 = por %p54, %p55
      %p57 = scmp.ne.s32.totalorder %s48, %s49
      %p58 = scmp.eq.s32.totalorder %s22, 0
      %p59 = por %p57, %p58
      %p60 = scmp.ne.s32.totalorder %s48, %s49
      %p61 = scmp.eq.s32.totalorder %s23, 1
      %p62 = por %p60, %p61
      %p64 = scmp.ne.s32.totalorder %s49, %s63
      %p65 = scmp.eq.s32.totalorder %s23, 0
      %p66 = por %p64, %p65
      %s67 = ssub.s32 %s17, %s24
      %p68 = scmp.eq.s32.totalorder %s67, 0
      %s70 = sadd.s32 %s69, 1
      %s71 = scalar_select %p68, %s69, %s70
      %p74 = pneg %p68
      %p75 = scmp.eq.s32.totalorder %s17, 1
      %p76 = por %p74, %p75
      %p77 = scmp.ne.s32.totalorder %s69, %s72
      %p78 = scmp.eq.s32.totalorder %s17, 0
      %p79 = por %p77, %p78
      %p80 = scmp.ne.s32.totalorder %s69, %s72
      %p81 = scmp.eq.s32.totalorder %s22, 1
      %p82 = por %p80, %p81
      %p83 = scmp.ne.s32.totalorder %s72, %s73
      %p84 = scmp.eq.s32.totalorder %s22, 0
      %p85 = por %p83, %p84
      %p86 = scmp.ne.s32.totalorder %s72, %s73
      %p87 = scmp.eq.s32.totalorder %s23, 1
      %p88 = por %p86, %p87
      %p90 = scmp.ne.s32.totalorder %s73, %s89
      %p91 = scmp.eq.s32.totalorder %s23, 0
      %p92 = por %p90, %p91
      %s93 = ssub.s32 %s17, %s24
      %p94 = scmp.eq.s32.totalorder %s93, 0
      %s96 = sadd.s32 %s95, 1
      %s97 = scalar_select %p94, %s95, %s96
      %p100 = pneg %p94
      %p101 = scmp.eq.s32.totalorder %s17, 1
      %p102 = por %p100, %p101
      %p103 = scmp.ne.s32.totalorder %s95, %s98
      %p104 = scmp.eq.s32.totalorder %s17, 0
      %p105 = por %p103, %p104
      %p106 = scmp.ne.s32.totalorder %s95, %s98
      %p107 = scmp.eq.s32.totalorder %s22, 1
      %p108 = por %p106, %p107
      %p109 = scmp.ne.s32.totalorder %s98, %s99
      %p110 = scmp.eq.s32.totalorder %s22, 0
      %p111 = por %p109, %p110
      %p112 = scmp.ne.s32.totalorder %s98, %s99
      %p113 = scmp.eq.s32.totalorder %s23, 1
      %p114 = por %p112, %p113
      %p116 = scmp.ne.s32.totalorder %s99, %s115
      %p117 = scmp.eq.s32.totalorder %s23, 0
      %p118 = por %p116, %p117
      %s119 = ssub.s32 %s17, %s24
      %p120 = scmp.eq.s32.totalorder %s119, 0
      %s122 = sadd.s32 %s121, 1
      %s123 = scalar_select %p120, %s121, %s122
      %p126 = pneg %p120
      %p127 = scmp.eq.s32.totalorder %s17, 1
      %p128 = por %p126, %p127
      %p129 = scmp.ne.s32.totalorder %s121, %s124
      %p130 = scmp.eq.s32.totalorder %s17, 0
      %p131 = por %p129, %p130
      %p132 = scmp.ne.s32.totalorder %s121, %s124
      %p133 = scmp.eq.s32.totalorder %s22, 1
      %p134 = por %p132, %p133
      %p135 = scmp.ne.s32.totalorder %s124, %s125
      %p136 = scmp.eq.s32.totalorder %s22, 0
      %p137 = por %p135, %p136
      %p138 = scmp.ne.s32.totalorder %s124, %s125
      %p139 = scmp.eq.s32.totalorder %s23, 1
      %p140 = por %p138, %p139
      %p142 = scmp.ne.s32.totalorder %s125, %s141
      %p143 = scmp.eq.s32.totalorder %s23, 0
      %p144 = por %p142, %p143
      %p145 = scmp.le.s32.totalorder 1, %s17
      %p146 = scmp.lt.s32.totalorder %s17, 3
      %p147 = pnand %p145, %p146
      %p148 = pneg %p147
      // Predicated region
      $region9: #{tpu_custom_call.1} parent=5 // pred_check
        _
      $region10: #{tpu_custom_call.1} parent=5 // pred_check_branch
        %150 = sbr.rel (%p147) target = $region12
      $region11: #{tpu_custom_call.1} parent=5 // pred_region
        %s151 = ssub.s32 %s17, 1
        // Predicated region
        $region13: #{tpu_custom_call.1} parent=11 // pred_check
          %p152 = pneg %p38
        $region14: #{tpu_custom_call.1} parent=11 // pred_check_branch
          %154 = sbr.rel (%p152) target = $region16
        $region15: #{tpu_custom_call.1} parent=11 // pred_region
          %s156 = ssub.s32 64, 64
          %157 = vsyncadd [#allocation3], %s156
          %s159 = sshll.u32 [#allocation2], 4
          %s160 = int_to_ptr.vmem [resolvable:$true] %s159
          %162 = dma.hbm_to_vmem [thread:$0]  %s0, 64, %s160, [#allocation3]
        $region16: #{tpu_custom_call.1} parent=11 // pred_fallthru
          _
        // Predicated region
        $region17: #{tpu_custom_call.1} parent=11 // pred_check
          %p163 = pneg %p59
        $region18: #{tpu_custom_call.1} parent=11 // pred_check_branch
          %165 = sbr.rel (%p163) target = $region20
        $region19: #{tpu_custom_call.1} parent=11 // pred_region
          _
        $region20: #{tpu_custom_call.1} parent=11 // pred_fallthru
          _
      $region12: #{tpu_custom_call.1} parent=5 // pred_fallthru
        _
      %p166 = scmp.lt.s32.totalorder %s17, 2
      // Predicated region
      $region21: #{tpu_custom_call.1} parent=5 // pred_check
        %p167 = pneg %p166
      $region22: #{tpu_custom_call.1} parent=5 // pred_check_branch
        %169 = sbr.rel (%p167) target = $region24
      $region23: #{tpu_custom_call.1} parent=5 // pred_region
        // Predicated region
        $region25: #{tpu_custom_call.1} parent=23 // pred_check
          %p170 = pneg %p79
        $region26: #{tpu_custom_call.1} parent=23 // pred_check_branch
          %172 = sbr.rel (%p170) target = $region28
        $region27: #{tpu_custom_call.1} parent=23 // pred_region
          %s173 = sand.u32 %s17, 1
          %s174 = scalar_lea.sflag [#allocation6], %s173
          %s175 = sand.u32 %s69, 1
          %s176 = smul.addr %s175, 8
          %s177 = scalar_lea.vmem [#allocation5], %s176
          %s179 = ssub.s32 128, 128
          %180 = vsyncadd %s174, %s179
          %s181 = smul.addr %s17, 2
          %s182 = smul.addr %s181, 64
          %s183 = scalar_lea.hbm %s2, %s182
          %s185 = sshll.u32 %s177, 4
          %s186 = int_to_ptr.vmem [resolvable:$true] %s185
          %188 = dma.hbm_to_vmem [thread:$0]  %s183, 128, %s186, %s174
        $region28: #{tpu_custom_call.1} parent=23 // pred_fallthru
          _
        // Predicated region
        $region29: #{tpu_custom_call.1} parent=23 // pred_check
          %p189 = pneg %p105
        $region30: #{tpu_custom_call.1} parent=23 // pred_check_branch
          %191 = sbr.rel (%p189) target = $region32
        $region31: #{tpu_custom_call.1} parent=23 // pred_region
          %s192 = sand.u32 %s17, 1
          %s193 = scalar_lea.sflag [#allocation6], %s192
          %s194 = sand.u32 %s95, 1
          %s195 = smul.addr %s194, 8
          %s196 = scalar_lea.vmem [#allocation7], %s195
          %s198 = ssub.s32 128, 128
          %199 = vsyncadd %s193, %s198
          %s200 = smul.addr %s17, 2
          %s201 = smul.addr %s200, 64
          %s202 = scalar_lea.hbm %s3, %s201
          %s204 = sshll.u32 %s196, 4
          %s205 = int_to_ptr.vmem [resolvable:$true] %s204
          %207 = dma.hbm_to_vmem [thread:$0]  %s202, 128, %s205, %s193
        $region32: #{tpu_custom_call.1} parent=23 // pred_fallthru
          _
      $region24: #{tpu_custom_call.1} parent=5 // pred_fallthru
        _
      %p208 = scmp.le.s32.totalorder 1, %s17
      %p209 = scmp.lt.s32.totalorder %s17, 3
      %p210 = pnand %p208, %p209
      %p211 = pneg %p210
      // Predicated region
      $region33: #{tpu_custom_call.1} parent=5 // pred_check
        _
      $region34: #{tpu_custom_call.1} parent=5 // pred_check_branch
        %213 = sbr.rel (%p210) target = $region36
      $region35: #{tpu_custom_call.1} parent=5 // pred_region
        %s214 = ssub.s32 %s17, 1
        // Predicated region
        $region37: #{tpu_custom_call.1} parent=35 // pred_check
          %p215 = pneg %p38
        $region38: #{tpu_custom_call.1} parent=35 // pred_check_branch
          %217 = sbr.rel (%p215) target = $region40
        $region39: #{tpu_custom_call.1} parent=35 // pred_region
          %218 = dma.done [#allocation3], 64
        $region40: #{tpu_custom_call.1} parent=35 // pred_fallthru
          _
        %s219 = sand.u32 %s22, 1
        %s220 = scalar_lea.sflag [#allocation6], %s219
        %s221 = sand.u32 %s72, 1
        %s222 = smul.addr %s221, 8
        %s223 = scalar_lea.vmem [#allocation5], %s222
        // Predicated region
        $region41: #{tpu_custom_call.1} parent=35 // pred_check
          %p224 = pneg %p85
        $region42: #{tpu_custom_call.1} parent=35 // pred_check_branch
          %226 = sbr.rel (%p224) target = $region44
        $region43: #{tpu_custom_call.1} parent=35 // pred_region
          %227 = dma.done %s220, 128
        $region44: #{tpu_custom_call.1} parent=35 // pred_fallthru
          _
        %s228 = sand.u32 %s22, 1
        %s229 = scalar_lea.sflag [#allocation6], %s228
        %s230 = sand.u32 %s98, 1
        %s231 = smul.addr %s230, 8
        %s232 = scalar_lea.vmem [#allocation7], %s231
        // Predicated region
        $region45: #{tpu_custom_call.1} parent=35 // pred_check
          %p233 = pneg %p111
        $region46: #{tpu_custom_call.1} parent=35 // pred_check_branch
          %235 = sbr.rel (%p233) target = $region48
        $region47: #{tpu_custom_call.1} parent=35 // pred_region
          %236 = dma.done %s229, 128
        $region48: #{tpu_custom_call.1} parent=35 // pred_fallthru
          _
        %p237 = pneg %p38
        %p238 = pneg %p35
        %p239 = pneg %p59
        %p240 = pneg %p56
        %s241 = sand.u32 %s22, 1
        %s242 = scalar_lea.sflag [#allocation6], %s241
        %s243 = sand.u32 %s72, 1
        %s244 = smul.addr %s243, 8
        %s245 = scalar_lea.vmem [#allocation5], %s244
        %p246 = pneg %p85
        %p247 = pneg %p82
        %s248 = sand.u32 %s22, 1
        %s249 = scalar_lea.sflag [#allocation6], %s248
        %s250 = sand.u32 %s98, 1
        %s251 = smul.addr %s250, 8
        %s252 = scalar_lea.vmem [#allocation7], %s251
        %p253 = pneg %p111
        %p254 = pneg %p108
        %p255 = pneg %p137
        %p256 = pneg %p134
        %s257 = sand.u32 %s124, 1
        %s258 = scalar_lea.sflag [#allocation4], %s257
        %s259 = sand.u32 %s124, 1
        %s260 = smul.addr %s259, 8
        %s261 = scalar_lea.vmem [#allocation8], %s260
        %v262 = vld [vmem:[%s223] sm:$0xff]
        %v263 = vld [vmem:[%s232] sm:$0xff]
        %v265 = vcombine.high %v262, %v262
        %vm267 = vcmask 1043456
        %v268 = vsel %vm267, %v262, 0.0
        %v269 = vsel %vm267, %v265, 0.0
        %v270 = vadd.f32 %v268, %v269
        %271 = vadd.xlane.f32.xlu0 %v270
        %v272 = vpop.xlane.xlu0 %271
        %v273 = vmul.f32 %v272, 0.00390625
        %v274 = vld [vmem:[#allocation2] sm:$0xf]
        %v275 = vld [vmem:[%s1] sm:$0x1]
        %v277 = vlaneseq
        %v278 = vand.u32 %v277, 127
        %v279 = vlaneseq
        %v280 = vshrl.u32 %v279, 7
        %v281 = vsub.s32 %v278, %v280
        %v282 = vrot.slane %v273, %v281
        %vm283 = vcmask 31744
        %v284 = vsel %vm283, %v282, 0
        %v287 = vsel %vm267, %v274, 0
        %289 = vmatprep.subr.mxu0 0.0
        %290 = vmatpush1.msra.mxu0 %v287
        %291 = vmatprep.subr.mxu0 0.0
        %292 = vmatpush1.msra.mxu0 0.0
        %293 = vmatprep.subr.mxu0 0.0
        %294 = vmatpush1.msra.mxu0 0.0
        %295 = vmatprep.subr.mxu0 0.0
        %296 = vmatpush1.msra.mxu0 0.0
        %297 = vmatprep.subr.mxu0 0.0
        %298 = vmatpush1.msra.mxu0 0.0
        %299 = vmatprep.subr.mxu0 0.0
        %300 = vmatpush1.msra.mxu0 0.0
        %301 = vmatprep.subr.mxu0 0.0
        %302 = vmatpush1.msra.mxu0 0.0
        %303 = vmatprep.subr.mxu0 0.0
        %304 = vmatpush1.msra.mxu0 0.0
        %305 = vmatprep.subr.mxu0 0.0
        %306 = vmatpush1.msra.mxu0 0.0
        %307 = vmatprep.subr.mxu0 0.0
        %308 = vmatpush1.msra.mxu0 0.0
        %309 = vmatprep.subr.mxu0 0.0
        %310 = vmatpush1.msra.mxu0 0.0
        %311 = vmatprep.subr.mxu0 0.0
        %312 = vmatpush1.msra.mxu0 0.0
        %313 = vmatprep.subr.mxu0 0.0
        %314 = vmatpush1.msra.mxu0 0.0
        %315 = vmatprep.subr.mxu0 0.0
        %316 = vmatpush1.msra.mxu0 0.0
        %317 = vmatprep.subr.mxu0 0.0
        %318 = vmatpush1.msra.mxu0 0.0
        %319 = vmatprep.subr.mxu0 0.0
        %320 = vmatpush1.msra.mxu0 0.0
        %321 = vmatprep.subr.mxu0 0.0
        %322 = vmatpush1.msra.mxu0 0.0
        %323 = vmatprep.subr.mxu0 0.0
        %324 = vmatpush1.msra.mxu0 0.0
        %325 = vmatprep.subr.mxu0 0.0
        %326 = vmatpush1.msra.mxu0 0.0
        %327 = vmatprep.subr.mxu0 0.0
        %328 = vmatpush1.msra.mxu0 0.0
        %329 = vmatprep.subr.mxu0 0.0
        %330 = vmatpush1.msra.mxu0 0.0
        %331 = vmatprep.subr.mxu0 0.0
        %332 = vmatpush1.msra.mxu0 0.0
        %333 = vmatprep.subr.mxu0 0.0
        %334 = vmatpush1.msra.mxu0 0.0
        %335 = vmatprep.subr.mxu0 0.0
        %336 = vmatpush1.msra.mxu0 0.0
        %337 = vmatprep.subr.mxu0 0.0
        %338 = vmatpush1.msra.mxu0 0.0
        %339 = vmatprep.subr.mxu0 0.0
        %340 = vmatpush1.msra.mxu0 0.0
        %341 = vmatprep.subr.mxu0 0.0
        %342 = vmatpush1.msra.mxu0 0.0
        %343 = vmatprep.subr.mxu0 0.0
        %344 = vmatpush1.msra.mxu0 0.0
        %345 = vmatprep.subr.mxu0 0.0
        %346 = vmatpush1.msra.mxu0 0.0
        %347 = vmatprep.subr.mxu0 0.0
        %348 = vmatpush1.msra.mxu0 0.0
        %349 = vmatprep.subr.mxu0 0.0
        %350 = vmatpush1.msra.mxu0 0.0
        %351 = vmatprep.subr.mxu0 0.0
        %352 = vmatpush1.msra.mxu0 0.0
        %353 = vmatprep.mubr.f32.mxu0 0.0
        %354 = vmatmul.mubr.f32.gmra.mrb[0].mxu0 %v284
        %v355 = vpop.f32.mrb[0].mxu0
        %v356 = vadd.f32 %v275, %v355
        %v357 = vpop.f32.mrb[0].mxu0
        %358 = vdwg.mxu0
        %v359 = vxor.u32 %v356, 2147483648
        %v360 = vmul.f32 %v359, 1.442695
        %v361 = vpow.pop %v360
        %v362 = vadd.f32 %v361, 1.0
        %v363 = vrcp.pop %v362
        %v364 = vmul.f32 1.0, %v363
        %v365 = vlaneseq
        %v366 = vshrl.u32 %v365, 7
        %v367 = vsub.s32 0, %v366
        %v368 = vrot.slane %v364, %v367
        %370 = vbcast.lane.b32.xlu0 %v368, 256
        %v371 = vpop.permute.xlu0 %370
        %v372 = vsub.f32 %v262, %v263
        %v374 = vcombine.high %v372, %v372
        %v376 = vmul.f32 %v371, %v372
        %v377 = vmul.f32 %v371, %v374
        %v380 = vcombine.low %v376, %v377
        %v382 = vadd.f32 %v263, %v380
        %383 = vst [vmem:[%s261] sm:$0xff] %v382
        %s384 = sand.u32 %s124, 1
        %s385 = scalar_lea.sflag [#allocation4], %s384
        %s386 = sand.u32 %s124, 1
        %s387 = smul.addr %s386, 8
        %s388 = scalar_lea.vmem [#allocation8], %s387
        // Predicated region
        $region49: #{tpu_custom_call.1} parent=35 // pred_check
          %p389 = pneg %p134
        $region50: #{tpu_custom_call.1} parent=35 // pred_check_branch
          %391 = sbr.rel (%p389) target = $region52
        $region51: #{tpu_custom_call.1} parent=35 // pred_region
          %s393 = ssub.s32 128, 128
          %394 = vsyncadd %s385, %s393
          %s395 = smul.addr %s22, 2
          %s396 = smul.addr %s395, 64
          %s397 = scalar_lea.hbm %s4, %s396
          %s399 = sshll.u32 %s388, 4
          %s400 = int_to_ptr.vmem [resolvable:$true] %s399
          %402 = dma.vmem_to_hbm [thread:$0]  %s400, 128, %s397, %s385
        $region52: #{tpu_custom_call.1} parent=35 // pred_fallthru
          _
      $region36: #{tpu_custom_call.1} parent=5 // pred_fallthru
        _
      %p403 = scmp.le.s32.totalorder 2, %s17
      // Predicated region
      $region53: #{tpu_custom_call.1} parent=5 // pred_check
        %p404 = pneg %p403
      $region54: #{tpu_custom_call.1} parent=5 // pred_check_branch
        %406 = sbr.rel (%p404) target = $region56
      $region55: #{tpu_custom_call.1} parent=5 // pred_region
        %s407 = ssub.s32 %s17, 2
        // Predicated region
        $region57: #{tpu_custom_call.1} parent=55 // pred_check
          %p408 = pneg %p140
        $region58: #{tpu_custom_call.1} parent=55 // pred_check_branch
          %410 = sbr.rel (%p408) target = $region60
        $region59: #{tpu_custom_call.1} parent=55 // pred_region
          %s411 = sand.u32 %s125, 1
          %s412 = scalar_lea.sflag [#allocation4], %s411
          %s413 = sand.u32 %s125, 1
          %s414 = smul.addr %s413, 8
          %s415 = scalar_lea.vmem [#allocation8], %s414
          %416 = dma.done %s412, 128
        $region60: #{tpu_custom_call.1} parent=55 // pred_fallthru
          _
      $region56: #{tpu_custom_call.1} parent=5 // pred_fallthru
        _
    $region6: #{tpu_custom_call.1} parent=1 // loop_footer
      %s21 = sadd.s32 1, %s17
    $region7: #{tpu_custom_call.1} parent=1 // loop_footer_branch
      %16 = sbr.rel target = $region3
    $region8: #{tpu_custom_call.1} parent=1 // loop_exit
      _
    %417 = vsyncpa [#allocation3], 1
    %s418 = scalar_lea.sflag [#allocation3], 1
    %419 = vsyncpa %s418, 1
    %420 = vsyncpa [#allocation6], 1
    %s421 = scalar_lea.sflag [#allocation6], 1
    %422 = vsyncpa %s421, 1
    %423 = vsyncpa [#allocation4], 1
    %s424 = scalar_lea.sflag [#allocation4], 1
    %425 = vsyncpa %s424, 1

</llo_original>
